<compile_context>
chip_gen: v7x
topology: tpu7x:2x2x1
jax: 0.10.0
libtpu: 0.0.40
codegen_flags: <defaults>
</compile_context>

<pallas_src>
import functools
import math

import jax
import jax.numpy as jnp
from jax.experimental import pallas as pl
from jax.experimental.pallas import tpu as pltpu

_LANES = 128


def _rmsnorm_kernel(x_ref, beta_ref, o_ref, *, eps):
    """Plain path: one normalized row per sublane row (dim on the lane axis)."""
    x_f32 = x_ref[...].astype(jnp.float32)                       # (tile_r, dim) f32
    mean_sq = jnp.mean(x_f32 * x_f32, axis=-1, keepdims=True)    # XLU reduce
    inv = jax.lax.rsqrt(mean_sq + eps)                           # EUP rsqrt
    # bf16->f32 upcast is exact, so reusing x_f32 == torch's x.to(dtype) round-trip.
    o_ref[...] = (x_f32 * inv * beta_ref[...]).astype(o_ref.dtype)


def _rmsnorm_folded_kernel(x_ref, beta_ref, o_ref, *, eps, dim, group):
    """Small-dim path: `group` = 128/dim original rows folded into each lane row.

    HBM traffic is fully lane-dense (128-wide blocks); each dim-wide lane
    segment is normalized independently with exact f32 math.
    """
    beta_row = beta_ref[...]                                     # (1, dim) f32, resident
    for k in range(group):                                       # static unroll (group <= 16)
        sl = slice(k * dim, (k + 1) * dim)
        xk = x_ref[:, sl].astype(jnp.float32)                    # (tile_r, dim)
        inv = jax.lax.rsqrt(jnp.mean(xk * xk, axis=-1, keepdims=True) + eps)
        o_ref[:, sl] = (xk * inv * beta_row).astype(o_ref.dtype)


def _round_up(n, m):
    return ((n + m - 1) // m) * m


def _pick_row_tile(rows, width, x_bytes, out_bytes, pack):
    """Row tile: ~1-4 MiB blocks, >= 8 grid steps when rows permit, sublane-packed."""
    row_bytes = width * max(x_bytes, out_bytes)
    # Upper bounds: ~4 MiB per block (bandwidth saturates by ~1-4 MiB; bigger just
    # burns VMEM) and enough grid depth for pipelining / v7x 2-TensorCore sharding.
    tile = min(max(1, (4 << 20) // row_bytes), pl.cdiv(rows, 8))
    # Lower bound: amortize the ~0.35us per-grid-step overhead (>= ~512 KiB or
    # 256 rows, whichever is smaller), and at least one packed sublane group.
    tile = max(tile, max(pack, min(max(1, (512 << 10) // row_bytes), 256)))
    tile = max(pack, (tile // pack) * pack)
    if tile >= rows:
        return int(rows)          # single full-extent block (always a legal block shape)
    return int(tile)


def rmsnorm(x, beta, eps=1e-6, *, out_dtype=None, row_tile=None):
    """x: (..., dim) array, beta: (dim,) scale. Matches torch RMSNorm.forward."""
    orig_shape = x.shape
    dim = orig_shape[-1]
    rows = math.prod(orig_shape[:-1]) if len(orig_shape) > 1 else 1

    # torch: x.to(dtype) * f32 rsqrt * f32 beta -> promotes to f32 output.
    if out_dtype is None:
        out_dtype = jnp.promote_types(x.dtype, jnp.float32)
    x_bytes = jnp.dtype(x.dtype).itemsize
    out_bytes = jnp.dtype(out_dtype).itemsize
    pack = 8 * max(1, 4 // x_bytes)      # sublane packing: f32 -> 8, bf16 -> 16, int8 -> 32

    x2d = x.reshape(rows, dim)
    beta_row = beta.reshape(1, dim).astype(jnp.float32)   # resident f32 tile

    # Small-dim lane folding: pack G = 128/dim rows per lane row (contiguity-
    # preserving reshape, no HBM copy) so stores are full-lane unmasked vst.
    group = _LANES // dim if (dim < _LANES and _LANES % dim == 0) else 1
    fold = 1 < group <= 16 and rows % group == 0
    if fold:
        rows_eff, width = rows // group, _LANES
        x2d = x2d.reshape(rows_eff, width)
        kernel = functools.partial(_rmsnorm_folded_kernel, eps=eps, dim=dim, group=group)
    else:
        # TODO(synk): dims that are huge (> ~1M elems) or small non-divisors of 128
        # still use a single lane-sparse block per row group; rare in practice.
        rows_eff, width = rows, dim
        kernel = functools.partial(_rmsnorm_kernel, eps=eps)

    tile_r = int(row_tile) if row_tile is not None else _pick_row_tile(
        rows_eff, width, x_bytes, out_bytes, pack)
    grid = pl.cdiv(rows_eff, tile_r)     # ragged edge handled by Pallas block masking

    # Scoped VMEM: double-buffered in/out tiles + in-kernel f32 temporaries +
    # resident beta, plus headroom; stays well under v7x's 64 MiB per-core VMEM.
    block_elems = tile_r * width
    needed = (block_elems * (x_bytes + out_bytes) * 2     # 2x-buffered x / out tiles
              + block_elems * 4 * 2                       # in-kernel f32 temporaries
              + dim * 4 * 2)                              # resident beta
    vmem_limit = int(min(max(needed + (8 << 20), 16 << 20), 56 << 20))

    out2d = pl.pallas_call(
        kernel,
        out_shape=jax.ShapeDtypeStruct((rows_eff, width), out_dtype),
        grid=(grid,),
        in_specs=[
            pl.BlockSpec((tile_r, width), lambda i: (i, 0)),   # x row tile
            pl.BlockSpec((1, dim), lambda i: (0, 0)),          # beta (resident, f32)
        ],
        out_specs=pl.BlockSpec((tile_r, width), lambda i: (i, 0)),
        compiler_params=pltpu.CompilerParams(
            dimension_semantics=("parallel",),
            vmem_limit_bytes=vmem_limit,
        ),
    )(x2d, beta_row)

    return out2d.reshape(orig_shape[:-1] + (dim,))


def rmsnorm_ref(x, beta, eps=1e-6):
    """Pure-JAX reference mirroring the PyTorch forward (f32 math, f32 output)."""
    x_f32 = x.astype(jnp.float32)
    mean_sq = jnp.mean(x_f32 * x_f32, axis=-1, keepdims=True)
    return x_f32 * jax.lax.rsqrt(mean_sq + eps) * beta.astype(jnp.float32)


if __name__ == "__main__":
    key = jax.random.PRNGKey(0)
    k0, k1, k2 = jax.random.split(key, 3)
    batch, seq, hidden = 2, 8, 32
    beta = jnp.ones((hidden,), dtype=jnp.float32)   # module __init__: torch.ones(dim)

    # Small-dim (lane-folded) path.
    x = jax.random.normal(k0, (batch, seq, hidden), dtype=jnp.float32)
    out = jax.block_until_ready(rmsnorm(x, beta, eps=1e-6))
    ref = rmsnorm_ref(x, beta, eps=1e-6)
    assert out.shape == x.shape, out.shape
    assert out.dtype == ref.dtype, (out.dtype, ref.dtype)
    assert jnp.allclose(out, ref, atol=1e-5, rtol=1e-5), "mismatch vs reference"

    # Ragged row count (plain path, masked edge block, no pad/slice in the wrapper).
    x_r = jax.random.normal(k1, (3, 5, hidden), dtype=jnp.float32)
    out_r = jax.block_until_ready(rmsnorm(x_r, beta, eps=1e-6))
    assert out_r.shape == x_r.shape, out_r.shape
    assert jnp.allclose(out_r, rmsnorm_ref(x_r, beta, eps=1e-6), atol=1e-5, rtol=1e-5), \
        "ragged mismatch vs reference"

    # bf16 input with dim >= 128 (plain lane-dense path; f32 output per torch promotion).
    hidden2 = 256
    beta2 = jnp.ones((hidden2,), dtype=jnp.float32)
    x_b = jax.random.normal(k2, (4, 8, hidden2), dtype=jnp.bfloat16)
    out_b = jax.block_until_ready(rmsnorm(x_b, beta2, eps=1e-6))
    ref_b = rmsnorm_ref(x_b, beta2, eps=1e-6)
    assert out_b.dtype == jnp.float32, out_b.dtype
    assert jnp.allclose(out_b, ref_b, atol=1e-5, rtol=1e-5), "bf16 mismatch vs reference"

    print("KERNEL_OK")
</pallas_src>

<mosaic_0001>
module attributes {stable_mosaic.version = 11 : i64} {
  func.func @_rmsnorm_folded_kernel(%arg0: i32, %arg1: memref<4x128xf32, #tpu.memory_space<vmem>>, %arg2: memref<1x32xf32, #tpu.memory_space<vmem>>, %arg3: memref<4x128xf32, #tpu.memory_space<vmem>>) attributes {dimension_semantics = [#tpu.dimension_semantics<parallel>], iteration_bounds = array<i64: 1>, scalar_prefetch = 0 : i64, scratch_operands = 0 : i64, tpu.core_type = #tpu.core_type<tc>, window_params = [{transform_indices = @transform_0, window_bounds = array<i64: 4, 128>}, {pipeline_mode = #tpu.pipeline_mode<synchronous>, transform_indices = @transform_1, window_bounds = array<i64: 1, 32>}, {transform_indices = @transform_2, window_bounds = array<i64: 4, 128>}]} {
    %c0 = arith.constant 0 : index
    %c0_0 = arith.constant 0 : index
    %0 = vector.load %arg2[%c0, %c0_0] : memref<1x32xf32, #tpu.memory_space<vmem>>, vector<1x32xf32>
    %c0_1 = arith.constant 0 : index
    %c0_2 = arith.constant 0 : index
    %1 = vector.load %arg1[%c0_1, %c0_2] : memref<4x128xf32, #tpu.memory_space<vmem>>, vector<4x32xf32>
    %2 = arith.mulf %1, %1 : vector<4x32xf32>
    %cst = arith.constant dense<0.000000e+00> : vector<4xf32>
    %3 = vector.multi_reduction <add>, %2, %cst [1] : vector<4x32xf32> to vector<4xf32>
    %4 = vector.shape_cast %3 : vector<4xf32> to vector<4x1xf32>
    %cst_3 = arith.constant 3.200000e+01 : f32
    %5 = vector.broadcast %cst_3 : f32 to vector<4x1xf32>
    %6 = arith.divf %4, %5 : vector<4x1xf32>
    %cst_4 = arith.constant 9.99999997E-7 : f32
    %7 = vector.broadcast %cst_4 : f32 to vector<4x1xf32>
    %8 = arith.addf %6, %7 : vector<4x1xf32>
    %9 = math.rsqrt %8 : vector<4x1xf32>
    %10 = vector.broadcast %9 : vector<4x1xf32> to vector<4x32xf32>
    %11 = arith.mulf %1, %10 : vector<4x32xf32>
    %12 = vector.broadcast %0 : vector<1x32xf32> to vector<4x32xf32>
    %13 = arith.mulf %11, %12 : vector<4x32xf32>
    %c0_5 = arith.constant 0 : index
    %c0_6 = arith.constant 0 : index
    %14 = vector.load %arg3[%c0_5, %c0_6] : memref<4x128xf32, #tpu.memory_space<vmem>>, vector<4x32xf32>
    tpu.vector_store %arg3[%c0_5, %c0_6], %13 {strides = array<i32>} : memref<4x128xf32, #tpu.memory_space<vmem>>, vector<4x32xf32>,
    %c0_7 = arith.constant 0 : index
    %c32 = arith.constant 32 : index
    %15 = vector.load %arg1[%c0_7, %c32] : memref<4x128xf32, #tpu.memory_space<vmem>>, vector<4x32xf32>
    %16 = arith.mulf %15, %15 : vector<4x32xf32>
    %cst_8 = arith.constant dense<0.000000e+00> : vector<4xf32>
    %17 = vector.multi_reduction <add>, %16, %cst_8 [1] : vector<4x32xf32> to vector<4xf32>
    %18 = vector.shape_cast %17 : vector<4xf32> to vector<4x1xf32>
    %cst_9 = arith.constant 3.200000e+01 : f32
    %19 = vector.broadcast %cst_9 : f32 to vector<4x1xf32>
    %20 = arith.divf %18, %19 : vector<4x1xf32>
    %cst_10 = arith.constant 9.99999997E-7 : f32
    %21 = vector.broadcast %cst_10 : f32 to vector<4x1xf32>
    %22 = arith.addf %20, %21 : vector<4x1xf32>
    %23 = math.rsqrt %22 : vector<4x1xf32>
    %24 = vector.broadcast %23 : vector<4x1xf32> to vector<4x32xf32>
    %25 = arith.mulf %15, %24 : vector<4x32xf32>
    %26 = vector.broadcast %0 : vector<1x32xf32> to vector<4x32xf32>
    %27 = arith.mulf %25, %26 : vector<4x32xf32>
    %c0_11 = arith.constant 0 : index
    %c32_12 = arith.constant 32 : index
    %28 = vector.load %arg3[%c0_11, %c32_12] : memref<4x128xf32, #tpu.memory_space<vmem>>, vector<4x32xf32>
    tpu.vector_store %arg3[%c0_11, %c32_12], %27 {strides = array<i32>} : memref<4x128xf32, #tpu.memory_space<vmem>>, vector<4x32xf32>,
    %c0_13 = arith.constant 0 : index
    %c64 = arith.constant 64 : index
    %29 = vector.load %arg1[%c0_13, %c64] : memref<4x128xf32, #tpu.memory_space<vmem>>, vector<4x32xf32>
    %30 = arith.mulf %29, %29 : vector<4x32xf32>
    %cst_14 = arith.constant dense<0.000000e+00> : vector<4xf32>
    %31 = vector.multi_reduction <add>, %30, %cst_14 [1] : vector<4x32xf32> to vector<4xf32>
    %32 = vector.shape_cast %31 : vector<4xf32> to vector<4x1xf32>
    %cst_15 = arith.constant 3.200000e+01 : f32
    %33 = vector.broadcast %cst_15 : f32 to vector<4x1xf32>
    %34 = arith.divf %32, %33 : vector<4x1xf32>
    %cst_16 = arith.constant 9.99999997E-7 : f32
    %35 = vector.broadcast %cst_16 : f32 to vector<4x1xf32>
    %36 = arith.addf %34, %35 : vector<4x1xf32>
    %37 = math.rsqrt %36 : vector<4x1xf32>
    %38 = vector.broadcast %37 : vector<4x1xf32> to vector<4x32xf32>
    %39 = arith.mulf %29, %38 : vector<4x32xf32>
    %40 = vector.broadcast %0 : vector<1x32xf32> to vector<4x32xf32>
    %41 = arith.mulf %39, %40 : vector<4x32xf32>
    %c0_17 = arith.constant 0 : index
    %c64_18 = arith.constant 64 : index
    %42 = vector.load %arg3[%c0_17, %c64_18] : memref<4x128xf32, #tpu.memory_space<vmem>>, vector<4x32xf32>
    tpu.vector_store %arg3[%c0_17, %c64_18], %41 {strides = array<i32>} : memref<4x128xf32, #tpu.memory_space<vmem>>, vector<4x32xf32>,
    %c0_19 = arith.constant 0 : index
    %c96 = arith.constant 96 : index
    %43 = vector.load %arg1[%c0_19, %c96] : memref<4x128xf32, #tpu.memory_space<vmem>>, vector<4x32xf32>
    %44 = arith.mulf %43, %43 : vector<4x32xf32>
    %cst_20 = arith.constant dense<0.000000e+00> : vector<4xf32>
    %45 = vector.multi_reduction <add>, %44, %cst_20 [1] : vector<4x32xf32> to vector<4xf32>
    %46 = vector.shape_cast %45 : vector<4xf32> to vector<4x1xf32>
    %cst_21 = arith.constant 3.200000e+01 : f32
    %47 = vector.broadcast %cst_21 : f32 to vector<4x1xf32>
    %48 = arith.divf %46, %47 : vector<4x1xf32>
    %cst_22 = arith.constant 9.99999997E-7 : f32
    %49 = vector.broadcast %cst_22 : f32 to vector<4x1xf32>
    %50 = arith.addf %48, %49 : vector<4x1xf32>
    %51 = math.rsqrt %50 : vector<4x1xf32>
    %52 = vector.broadcast %51 : vector<4x1xf32> to vector<4x32xf32>
    %53 = arith.mulf %43, %52 : vector<4x32xf32>
    %54 = vector.broadcast %0 : vector<1x32xf32> to vector<4x32xf32>
    %55 = arith.mulf %53, %54 : vector<4x32xf32>
    %c0_23 = arith.constant 0 : index
    %c96_24 = arith.constant 96 : index
    %56 = vector.load %arg3[%c0_23, %c96_24] : memref<4x128xf32, #tpu.memory_space<vmem>>, vector<4x32xf32>
    tpu.vector_store %arg3[%c0_23, %c96_24], %55 {strides = array<i32>} : memref<4x128xf32, #tpu.memory_space<vmem>>, vector<4x32xf32>,
    return
  }
  func.func @transform_0(%arg0: i32) -> (i32, i32) {
    %c0_i32 = arith.constant 0 : i32
    %c0_i32_0 = arith.constant 0 : i32
    return %arg0, %c0_i32 : i32, i32
  }
  func.func @transform_1(%arg0: i32) -> (i32, i32) {
    %c0_i32 = arith.constant 0 : i32
    %c0_i32_0 = arith.constant 0 : i32
    %c0_i32_1 = arith.constant 0 : i32
    return %c0_i32, %c0_i32_0 : i32, i32
  }
  func.func @transform_2(%arg0: i32) -> (i32, i32) {
    %c0_i32 = arith.constant 0 : i32
    %c0_i32_0 = arith.constant 0 : i32
    return %arg0, %c0_i32 : i32, i32
  }
}

</mosaic_0001>

<llo_original>
// kernel: tpu_custom_call.1
$region0: #{tpu_custom_call.1}
  #allocation0 [shape = 'u32[]', space=smem, size = 0x4, offset = 0x4, fixed_abs, tag = 'smem constant byte address 0x4 - core index']
  #allocation1 [shape = 'u32[144,128]{1,0:T(1,128)}', space=vmem, size = 0x12000, scoped, tag = 'internal scratch']
  %s0 = inlined_call_operand.hbm [shape: f32[4,128], index: 0, kind: input, shape index: {}]
  %s1 = inlined_call_operand.vmem [shape: f32[1,32], index: 1, kind: input, shape index: {}]
  %s2 = inlined_call_operand.hbm [shape: f32[4,128], index: 2, kind: output, shape index: {}]
  %s3 = sld [smem:[#allocation0]]
  $region22: #{tpu_custom_call.1} parent=0
    _
  %s5 = ssub.s32 1, %s3
  %s6 = scalar_select 0, %s5, %s3
  $region1: #{tpu_custom_call.1} parent=0
    #allocation2 [shape = 'u8[2048]{0}', space=vmem, size = 0x800, scoped, tag = 'input window, operand 0, single buffered']
    #allocation3 [shape = 's32[1]{0}', space=sflag, size = 0x4, scoped, tag = 'scoped memory for tpu_custom_call.1']
    #allocation4 [shape = 's32[1]{0}', space=sflag, size = 0x4, scoped, tag = 'scoped memory for tpu_custom_call.1']
    #allocation5 [shape = 'u8[2048]{0}', space=vmem, size = 0x800, scoped, tag = 'output window, operand 0, single buffered']
    %7 = vsyncpa [#allocation3], 0
    %8 = vsyncpa [#allocation4], 0
    // Predicated region
    $region2: #{tpu_custom_call.1} parent=1 // pred_check
      _
    $region3: #{tpu_custom_call.1} parent=1 // pred_check_branch
      %10 = sbr.rel (0) target = $region5
    $region4: #{tpu_custom_call.1} parent=1 // pred_region
      %s12 = ssub.s32 64, 64
      %13 = vsyncadd [#allocation3], %s12
      %s15 = sshll.u32 [#allocation2], 4
      %s16 = int_to_ptr.vmem [resolvable:$true] %s15
      %18 = dma.hbm_to_vmem [thread:$0]  %s0, 64, %s16, [#allocation3]
    $region5: #{tpu_custom_call.1} parent=1 // pred_fallthru
      _
    // Predicated region
    $region6: #{tpu_custom_call.1} parent=1 // pred_check
      _
    $region7: #{tpu_custom_call.1} parent=1 // pred_check_branch
      %20 = sbr.rel (0) target = $region9
    $region8: #{tpu_custom_call.1} parent=1 // pred_region
      _
    $region9: #{tpu_custom_call.1} parent=1 // pred_fallthru
      _
    // Predicated region
    $region10: #{tpu_custom_call.1} parent=1 // pred_check
      _
    $region11: #{tpu_custom_call.1} parent=1 // pred_check_branch
      %22 = sbr.rel (0) target = $region13
    $region12: #{tpu_custom_call.1} parent=1 // pred_region
      %23 = dma.done [#allocation3], 64
    $region13: #{tpu_custom_call.1} parent=1 // pred_fallthru
      _
    %v24 = vld [vmem:[%s1] sm:$0x1]
    %v25 = vld [vmem:[#allocation2] sm:$0xf]
    %v26 = vmul.f32 %v25, %v25
    %vm27 = vcmask 257024
    %v28 = vsel %vm27, %v26, 0.0
    %29 = vadd.xlane.f32.xlu0 %v28
    %v30 = vpop.xlane.xlu0 %29
    %v31 = vrcp.pop 32.0
    %v32 = vmul.f32 %v30, %v31
    %v33 = vadd.f32 %v32, 1e-06
    %v34 = vrsqrt.pop %v33
    %v35 = vmul.f32 %v25, %v34
    %v37 = vlaneseq
    %v38 = vshrl.u32 %v37, 7
    %v39 = vsub.s32 0, %v38
    %v40 = vrot.slane %v24, %v39
    %v42 = vmul.f32 %v35, %v40
    %43 = vst.msk [vmem:[#allocation5] sm:$0xf] %vm27, %v42
    %v44 = vld [vmem:[#allocation2] sm:$0xf]
    %v45 = vmul.f32 %v44, %v44
    %47 = vrot.lane.b32.xlu0 %v45, 96
    %v48 = vpop.permute.xlu0 %47
    %v50 = vsel %vm27, %v48, 0.0
    %51 = vadd.xlane.f32.xlu0 %v50
    %v52 = vpop.xlane.xlu0 %51
    %v53 = vmul.f32 %v52, %v31
    %v54 = vadd.f32 %v53, 1e-06
    %v55 = vrsqrt.pop %v54
    %v56 = vmul.f32 %v44, %v55
    %57 = vrot.lane.b32.xlu0 %v40, 32
    %v58 = vpop.permute.xlu0 %57
    %v60 = vmul.f32 %v56, %v58
    %vm61 = vcmask 519424
    %62 = vst.msk [vmem:[#allocation5] sm:$0xf] %vm61, %v60
    %v63 = vld [vmem:[#allocation2] sm:$0xf]
    %v64 = vmul.f32 %v63, %v63
    %66 = vrot.lane.b32.xlu0 %v64, 64
    %v67 = vpop.permute.xlu0 %66
    %v69 = vsel %vm27, %v67, 0.0
    %70 = vadd.xlane.f32.xlu0 %v69
    %v71 = vpop.xlane.xlu0 %70
    %v72 = vmul.f32 %v71, %v31
    %v73 = vadd.f32 %v72, 1e-06
    %v74 = vrsqrt.pop %v73
    %v75 = vmul.f32 %v63, %v74
    %76 = vrot.lane.b32.xlu0 %v40, 64
    %v77 = vpop.permute.xlu0 %76
    %v79 = vmul.f32 %v75, %v77
    %vm80 = vcmask 781824
    %81 = vst.msk [vmem:[#allocation5] sm:$0xf] %vm80, %v79
    %v82 = vld [vmem:[#allocation2] sm:$0xf]
    %v83 = vmul.f32 %v82, %v82
    %85 = vrot.lane.b32.xlu0 %v83, 32
    %v86 = vpop.permute.xlu0 %85
    %v88 = vsel %vm27, %v86, 0.0
    %89 = vadd.xlane.f32.xlu0 %v88
    %v90 = vpop.xlane.xlu0 %89
    %v91 = vmul.f32 %v90, %v31
    %v92 = vadd.f32 %v91, 1e-06
    %v93 = vrsqrt.pop %v92
    %v94 = vmul.f32 %v82, %v93
    %95 = vrot.lane.b32.xlu0 %v40, 96
    %v96 = vpop.permute.xlu0 %95
    %v98 = vmul.f32 %v94, %v96
    %vm99 = vcmask 1044224
    %100 = vst.msk [vmem:[#allocation5] sm:$0xf] %vm99, %v98
    // Predicated region
    $region14: #{tpu_custom_call.1} parent=1 // pred_check
      _
    $region15: #{tpu_custom_call.1} parent=1 // pred_check_branch
      %102 = sbr.rel (0) target = $region17
    $region16: #{tpu_custom_call.1} parent=1 // pred_region
      %s104 = ssub.s32 64, 64
      %105 = vsyncadd [#allocation4], %s104
      %s107 = sshll.u32 [#allocation5], 4
      %s108 = int_to_ptr.vmem [resolvable:$true] %s107
      %110 = dma.vmem_to_hbm [thread:$0]  %s108, 64, %s2, [#allocation4]
    $region17: #{tpu_custom_call.1} parent=1 // pred_fallthru
      _
    // Predicated region
    $region18: #{tpu_custom_call.1} parent=1 // pred_check
      _
    $region19: #{tpu_custom_call.1} parent=1 // pred_check_branch
      %112 = sbr.rel (0) target = $region21
    $region20: #{tpu_custom_call.1} parent=1 // pred_region
      %113 = dma.done [#allocation4], 64
    $region21: #{tpu_custom_call.1} parent=1 // pred_fallthru
      _
    %114 = vsyncpa [#allocation3], 1
    %115 = vsyncpa [#allocation4], 1

</llo_original>
